<compile_context>
chip_gen: v7x
topology: tpu7x:2x2x1
jax: 0.10.0
libtpu: 0.0.40
codegen_flags: <defaults>
</compile_context>

<pallas_src>
import functools

import jax
import jax.numpy as jnp
from jax import lax
from jax.experimental import pallas as pl
from jax.experimental.pallas import tpu as pltpu


def _deltanet_seq_kernel(x_ref, ws_ref, wf0_ref, wfb_ref, out_ref, wf_ref,
                         *, dim_out, dim_hidden):
    """One grid step == one DeltaNet timestep.

    x_ref   : (B, dim_in+1)        bf16  current timestep input, ones column appended
    ws_ref  : (dim_total, dim_in+1) bf16 slow weights, bias folded in, lr row first
    wf0_ref : (O, H)                f32  initial fast-weight state (read at step 0 only)
    wfb_ref : (1, O)                f32  fast bias
    out_ref : (B, O)                f32  per-timestep output (block index advances with t)
    wf_ref  : (O, H)                f32  fast-weight state; constant block index keeps it
                                         resident in VMEM for the whole grid, written back
                                         to HBM (aliased onto wf0's buffer) at the end.
    """
    H, O = dim_hidden, dim_out
    B = x_ref.shape[0]
    f32 = jnp.float32
    t = pl.program_id(0)

    @pl.when(t == 0)
    def _():
        wf_ref[...] = wf0_ref[...]

    # ---- Fused slow projection: one bf16 MXU matmul, f32 accumulate. ------------------
    # Weights stay in nn.Linear (out, in) layout; the transpose is folded into the
    # dot_general dimension numbers (no in-kernel XLU transpose).  Bias comes in via the
    # appended ones column of x.
    slow = lax.dot_general(x_ref[...], ws_ref[...], (((1,), (1,)), ((), ())),
                           preferred_element_type=f32)            # (B, dim_total)

    lr = jax.nn.sigmoid(slow[:, 0:1])                             # (B, 1)  lr at lane 0
    k = slow[:, 1:1 + H]                                          # (B, H)
    v = slow[:, 1 + H:1 + H + O]                                  # (B, O)
    q = slow[:, 1 + H + O:1 + H + O + H]                          # (B, H)

    def _softmax(z):                                              # softmax over lanes
        z = z - jnp.max(z, axis=1, keepdims=True)
        e = jnp.exp(z)
        return e * pl.reciprocal(jnp.sum(e, axis=1, keepdims=True), approx=True)

    wf = wf_ref[...]                                              # (O, H) f32 state
    wfb = wfb_ref[...]                                            # (1, O)

    # ---- v_bar = W_fast(softmax(k)) ---------------------------------------------------
    # Fast-weight matmuls stay f32: they are tiny on the MXU and keeping them f32 stops
    # bf16 rounding of the recurrent state from compounding across timesteps.
    sk = _softmax(k)
    v_bar = lax.dot_general(sk, wf, (((1,), (1,)), ((), ())),
                            preferred_element_type=f32) + wfb     # (B, O)

    # ---- delta[o,h] = (lr[o]/B) * sum_b (v - v_bar)[b,o] * sigmoid(k)[b,h] -------------
    # The reference broadcast lr(B,1) * (v - v_bar).T(O,B) is only legal when B == O
    # (asserted in the wrapper); lr then acts as an (O,1) column scale that commutes out
    # of the batch contraction, so no (O,B) transposed intermediate is needed.
    err = v - v_bar
    sig_k = jax.nn.sigmoid(k)
    delta = lax.dot_general(err, sig_k, (((0,), (0,)), ((), ())),
                            preferred_element_type=f32)           # (O, H)
    new_wf = wf + (lr * f32(1.0 / B)) * delta                     # 1/B folded into lr
    wf_ref[...] = new_wf                                          # state update in VMEM

    # ---- out_t = W_fast_new(softmax(q)) ------------------------------------------------
    sq = _softmax(q)
    out_ref[...] = lax.dot_general(sq, new_wf, (((1,), (1,)), ((), ())),
                                   preferred_element_type=f32) + wfb


@functools.partial(jax.jit, donate_argnums=(3,))
def deltanet_forward(x_seq, w_slow_w, w_slow_b, w_fast_w, w_fast_b):
    """Run T sequential DeltaNet steps (recurrent fast-weight update) in ONE pallas_call.

    x_seq: (T, B, dim_in).  Returns (out_seq (T, B, dim_out), new_w_fast (dim_out, H)).
    w_fast_w is donated and updated in place (input_output_aliases), matching the
    PyTorch in-place `W_fast.weight.data += delta`.
    """
    T, B, dim_in = x_seq.shape
    O, H = w_fast_w.shape
    dim_total = O + 2 * H + 1
    assert w_slow_w.shape == (dim_total, dim_in)
    assert w_slow_b.shape == (dim_total,)
    # The reference broadcast lr(B,1) * (v - v_bar).T(O,B) is only legal when B == O.
    assert B == O, "DeltaNet reference semantics require batch size == dim_out"

    f32, bf16 = jnp.float32, jnp.bfloat16
    Dp = dim_in + 1

    # Fold the slow bias into the matmul (ones column) and roll the rows so the lr row is
    # first (lr lands in lane 0 of the fused projection).  Ship the big operands as bf16.
    ws_b = jnp.concatenate([w_slow_w, w_slow_b[:, None]], axis=1)          # (dim_total, Dp)
    ws_aug = jnp.concatenate([ws_b[dim_total - 1:], ws_b[:dim_total - 1]],
                             axis=0).astype(bf16)                          # lr row first
    x_aug = jnp.concatenate([x_seq.astype(f32), jnp.ones((T, B, 1), f32)],
                            axis=2).astype(bf16)                           # (T, B, Dp)
    wfb = w_fast_b.reshape(1, O).astype(f32)
    wf0 = w_fast_w.astype(f32)

    flops = T * (2 * B * Dp * dim_total + 6 * B * H * O)
    transcendentals = T * (4 * B * H + 3 * B)
    bytes_accessed = (x_aug.size * 2 + ws_aug.size * 2 + 2 * wf0.size * 4
                      + wfb.size * 4 + T * B * O * 4)

    kernel = functools.partial(_deltanet_seq_kernel, dim_out=O, dim_hidden=H)
    out_seq, new_wf = pl.pallas_call(
        kernel,
        grid=(T,),
        in_specs=[
            pl.BlockSpec((None, B, Dp), lambda t: (t, 0, 0)),    # x_t, pipelined over t
            pl.BlockSpec((dim_total, Dp), lambda t: (0, 0)),     # slow weights, resident
            pl.BlockSpec((O, H), lambda t: (0, 0)),              # initial fast weights
            pl.BlockSpec((1, O), lambda t: (0, 0)),              # fast bias
        ],
        out_specs=(
            pl.BlockSpec((None, B, O), lambda t: (t, 0, 0)),     # per-step outputs
            pl.BlockSpec((O, H), lambda t: (0, 0)),              # fast-weight state
        ),
        out_shape=(jax.ShapeDtypeStruct((T, B, O), f32),
                   jax.ShapeDtypeStruct((O, H), f32)),
        input_output_aliases={2: 1},                             # wf0 -> new_wf in place
        compiler_params=pltpu.CompilerParams(
            dimension_semantics=("arbitrary",)),                 # timestep axis is serial
        cost_estimate=pl.CostEstimate(flops=flops,
                                      transcendentals=transcendentals,
                                      bytes_accessed=bytes_accessed),
    )(x_aug, ws_aug, wf0, wfb)
    return out_seq, new_wf


def deltanet_reference(x_seq, w_slow_w, w_slow_b, w_fast_w, w_fast_b,
                       *, dim_out, dim_hidden):
    """Pure-JAX f32 reference: T sequential calls of the PyTorch forward."""
    H, O = dim_hidden, dim_out
    wf = w_fast_w
    outs = []
    for t in range(x_seq.shape[0]):
        x = x_seq[t]
        slow = x @ w_slow_w.T + w_slow_b
        k = slow[:, :H]
        v = slow[:, H:H + O]
        q = slow[:, H + O:H + O + H]
        lr = jax.nn.sigmoid(slow[:, H + O + H:H + O + H + 1])
        sk = jax.nn.softmax(k, axis=1)
        v_bar = sk @ wf.T + w_fast_b
        delta = (lr * (v - v_bar).T) @ jax.nn.sigmoid(k) / x.shape[0]
        wf = wf + delta
        outs.append(jax.nn.softmax(q, axis=1) @ wf.T + w_fast_b)
    return jnp.stack(outs, axis=0), wf


if __name__ == "__main__":
    # NOTE: B must equal dim_out for the reference's broadcast `lr * (v - v_bar).T`
    # to be legal (same constraint as in PyTorch).
    T, B = 6, 8
    dim_in, dim_hidden, dim_out = 16, 32, 8
    dim_total = dim_out + 2 * dim_hidden + 1

    key = jax.random.PRNGKey(0)
    k1, k2, k3, k4 = jax.random.split(key, 4)

    bound_slow = 1.0 / (dim_in ** 0.5)
    w_slow_w = jax.random.uniform(k1, (dim_total, dim_in), jnp.float32,
                                  minval=-bound_slow, maxval=bound_slow)
    w_slow_b = jax.random.uniform(k2, (dim_total,), jnp.float32,
                                  minval=-bound_slow, maxval=bound_slow)
    w_fast_w = jnp.zeros((dim_out, dim_hidden), jnp.float32)   # constant-init 0, as in module
    bound_fast = 1.0 / (dim_hidden ** 0.5)
    w_fast_b = jax.random.uniform(k3, (dim_out,), jnp.float32,
                                  minval=-bound_fast, maxval=bound_fast)
    x_seq = jax.random.normal(k4, (T, B, dim_in), jnp.float32)

    # Reference computed BEFORE the kernel call (the kernel donates / aliases w_fast_w).
    ref_outs, ref_wf = deltanet_reference(x_seq, w_slow_w, w_slow_b, w_fast_w, w_fast_b,
                                          dim_out=dim_out, dim_hidden=dim_hidden)

    out_seq, new_wf = deltanet_forward(x_seq, w_slow_w, w_slow_b, w_fast_w, w_fast_b)
    jax.block_until_ready((out_seq, new_wf))

    assert out_seq.shape == (T, B, dim_out)
    assert new_wf.shape == (dim_out, dim_hidden)
    # Tolerance relaxed vs the f32 reference: the slow projection runs with bf16 MXU
    # operands (f32 accumulate); the fast-weight path stays f32 so errors do not compound.
    assert jnp.allclose(out_seq, ref_outs, rtol=2e-2, atol=2e-2), "output mismatch vs reference"
    assert jnp.allclose(new_wf, ref_wf, rtol=2e-2, atol=2e-2), "fast-weight mismatch vs reference"

    print("KERNEL_OK")
</pallas_src>

<mosaic_0001>
module attributes {stable_mosaic.version = 11 : i64} {
  func.func @_deltanet_seq_kernel(%arg0: i32, %arg1: memref<1x8x17xbf16, #tpu.memory_space<vmem>>, %arg2: memref<73x17xbf16, #tpu.memory_space<vmem>>, %arg3: memref<8x32xf32, #tpu.memory_space<vmem>>, %arg4: memref<1x8xf32, #tpu.memory_space<vmem>>, %arg5: memref<1x8x8xf32, #tpu.memory_space<vmem>>, %arg6: memref<8x32xf32, #tpu.memory_space<vmem>>) attributes {dimension_semantics = [#tpu.dimension_semantics<arbitrary>], iteration_bounds = array<i64: 6>, scalar_prefetch = 0 : i64, scratch_operands = 0 : i64, tpu.core_type = #tpu.core_type<tc>, window_params = [{transform_indices = @transform_0, window_bounds = array<i64: 1, 8, 17>}, {pipeline_mode = #tpu.pipeline_mode<synchronous>, transform_indices = @transform_1, window_bounds = array<i64: 73, 17>}, {pipeline_mode = #tpu.pipeline_mode<synchronous>, transform_indices = @transform_2, window_bounds = array<i64: 8, 32>}, {pipeline_mode = #tpu.pipeline_mode<synchronous>, transform_indices = @transform_3, window_bounds = array<i64: 1, 8>}, {transform_indices = @transform_4, window_bounds = array<i64: 1, 8, 8>}, {pipeline_mode = #tpu.pipeline_mode<synchronous>, transform_indices = @transform_5, window_bounds = array<i64: 8, 32>}]} {
    %c0_i32 = arith.constant 0 : i32
    %0 = arith.cmpi eq, %arg0, %c0_i32 : i32
    %1 = arith.extui %0 : i1 to i32
    %c0_i32_0 = arith.constant 0 : i32
    %2 = arith.cmpi ne, %1, %c0_i32_0 : i32
    scf.if %2 {
      %c0_24 = arith.constant 0 : index
      %c0_25 = arith.constant 0 : index
      %60 = vector.load %arg3[%c0_24, %c0_25] : memref<8x32xf32, #tpu.memory_space<vmem>>, vector<8x32xf32>
      %c0_26 = arith.constant 0 : index
      %c0_27 = arith.constant 0 : index
      %61 = vector.load %arg6[%c0_26, %c0_27] : memref<8x32xf32, #tpu.memory_space<vmem>>, vector<8x32xf32>
      tpu.vector_store %arg6[%c0_26, %c0_27], %60 {strides = array<i32>} : memref<8x32xf32, #tpu.memory_space<vmem>>, vector<8x32xf32>,
    } else {
    }
    %c0 = arith.constant 0 : index
    %c0_1 = arith.constant 0 : index
    %c0_2 = arith.constant 0 : index
    %3 = vector.load %arg1[%c0, %c0_1, %c0_2] : memref<1x8x17xbf16, #tpu.memory_space<vmem>>, vector<1x8x17xbf16>
    %4 = vector.shape_cast %3 : vector<1x8x17xbf16> to vector<8x17xbf16>
    %c0_3 = arith.constant 0 : index
    %c0_4 = arith.constant 0 : index
    %5 = vector.load %arg2[%c0_3, %c0_4] : memref<73x17xbf16, #tpu.memory_space<vmem>>, vector<73x17xbf16>
    %cst = arith.constant dense<0.000000e+00> : vector<8x73xf32>
    %6 = tpu.matmul %4, %5, %cst {dimension_numbers = #tpu.dot_dimension_numbers<[1], [1], [0], [0], [0, 0, 1, 0], [], []>} : vector<8x17xbf16>, vector<73x17xbf16>, vector<8x73xf32> -> vector<8x73xf32>
    %7 = vector.extract_strided_slice %6 {offsets = [0, 0], sizes = [8, 1], strides = [1, 1]} : vector<8x73xf32> to vector<8x1xf32>
    %8 = arith.negf %7 : vector<8x1xf32>
    %9 = math.exp %8 : vector<8x1xf32>
    %cst_5 = arith.constant 1.000000e+00 : f32
    %10 = vector.broadcast %cst_5 : f32 to vector<8x1xf32>
    %11 = arith.addf %10, %9 : vector<8x1xf32>
    %12 = arith.divf %10, %11 : vector<8x1xf32>
    %13 = vector.extract_strided_slice %6 {offsets = [0, 1], sizes = [8, 32], strides = [1, 1]} : vector<8x73xf32> to vector<8x32xf32>
    %14 = vector.extract_strided_slice %6 {offsets = [0, 33], sizes = [8, 8], strides = [1, 1]} : vector<8x73xf32> to vector<8x8xf32>
    %15 = vector.extract_strided_slice %6 {offsets = [0, 41], sizes = [8, 32], strides = [1, 1]} : vector<8x73xf32> to vector<8x32xf32>
    %c0_6 = arith.constant 0 : index
    %c0_7 = arith.constant 0 : index
    %16 = vector.load %arg6[%c0_6, %c0_7] : memref<8x32xf32, #tpu.memory_space<vmem>>, vector<8x32xf32>
    %c0_8 = arith.constant 0 : index
    %c0_9 = arith.constant 0 : index
    %17 = vector.load %arg4[%c0_8, %c0_9] : memref<1x8xf32, #tpu.memory_space<vmem>>, vector<1x8xf32>
    %cst_10 = arith.constant dense<0xFF800000> : vector<8xf32>
    %18 = vector.multi_reduction <maximumf>, %13, %cst_10 [1] : vector<8x32xf32> to vector<8xf32>
    %19 = vector.shape_cast %18 : vector<8xf32> to vector<8x1xf32>
    %20 = vector.broadcast %19 : vector<8x1xf32> to vector<8x32xf32>
    %21 = arith.subf %13, %20 : vector<8x32xf32>
    %22 = math.exp %21 : vector<8x32xf32>
    %cst_11 = arith.constant dense<0.000000e+00> : vector<8xf32>
    %23 = vector.multi_reduction <add>, %22, %cst_11 [1] : vector<8x32xf32> to vector<8xf32>
    %24 = vector.shape_cast %23 : vector<8xf32> to vector<8x1xf32>
    %25 = tpu.reciprocal %24 {approx = true} : vector<8x1xf32> -> vector<8x1xf32>
    %26 = vector.broadcast %25 : vector<8x1xf32> to vector<8x32xf32>
    %27 = arith.mulf %22, %26 : vector<8x32xf32>
    %cst_12 = arith.constant dense<0.000000e+00> : vector<8x8xf32>
    %28 = tpu.matmul %27, %16, %cst_12 {dimension_numbers = #tpu.dot_dimension_numbers<[1], [1], [0], [0], [0, 0, 1, 0], [], []>} : vector<8x32xf32>, vector<8x32xf32>, vector<8x8xf32> -> vector<8x8xf32>
    %29 = vector.broadcast %17 : vector<1x8xf32> to vector<8x8xf32>
    %30 = arith.addf %28, %29 : vector<8x8xf32>
    %31 = arith.subf %14, %30 : vector<8x8xf32>
    %32 = arith.negf %13 : vector<8x32xf32>
    %33 = math.exp %32 : vector<8x32xf32>
    %cst_13 = arith.constant 1.000000e+00 : f32
    %34 = vector.broadcast %cst_13 : f32 to vector<8x32xf32>
    %35 = arith.addf %34, %33 : vector<8x32xf32>
    %36 = arith.divf %34, %35 : vector<8x32xf32>
    %cst_14 = arith.constant dense<0.000000e+00> : vector<8x32xf32>
    %37 = tpu.matmul %31, %36, %cst_14 {dimension_numbers = #tpu.dot_dimension_numbers<[0], [0], [1], [1], [0, 1, 1, 1], [], []>} : vector<8x8xf32>, vector<8x32xf32>, vector<8x32xf32> -> vector<8x32xf32>
    %cst_15 = arith.constant 1.250000e-01 : f32
    %38 = vector.broadcast %cst_15 : f32 to vector<8x1xf32>
    %39 = arith.mulf %12, %38 : vector<8x1xf32>
    %40 = vector.broadcast %39 : vector<8x1xf32> to vector<8x32xf32>
    %41 = arith.mulf %40, %37 : vector<8x32xf32>
    %42 = arith.addf %16, %41 : vector<8x32xf32>
    %c0_16 = arith.constant 0 : index
    %c0_17 = arith.constant 0 : index
    %43 = vector.load %arg6[%c0_16, %c0_17] : memref<8x32xf32, #tpu.memory_space<vmem>>, vector<8x32xf32>
    tpu.vector_store %arg6[%c0_16, %c0_17], %42 {strides = array<i32>} : memref<8x32xf32, #tpu.memory_space<vmem>>, vector<8x32xf32>,
    %cst_18 = arith.constant dense<0xFF800000> : vector<8xf32>
    %44 = vector.multi_reduction <maximumf>, %15, %cst_18 [1] : vector<8x32xf32> to vector<8xf32>
    %45 = vector.shape_cast %44 : vector<8xf32> to vector<8x1xf32>
    %46 = vector.broadcast %45 : vector<8x1xf32> to vector<8x32xf32>
    %47 = arith.subf %15, %46 : vector<8x32xf32>
    %48 = math.exp %47 : vector<8x32xf32>
    %cst_19 = arith.constant dense<0.000000e+00> : vector<8xf32>
    %49 = vector.multi_reduction <add>, %48, %cst_19 [1] : vector<8x32xf32> to vector<8xf32>
    %50 = vector.shape_cast %49 : vector<8xf32> to vector<8x1xf32>
    %51 = tpu.reciprocal %50 {approx = true} : vector<8x1xf32> -> vector<8x1xf32>
    %52 = vector.broadcast %51 : vector<8x1xf32> to vector<8x32xf32>
    %53 = arith.mulf %48, %52 : vector<8x32xf32>
    %cst_20 = arith.constant dense<0.000000e+00> : vector<8x8xf32>
    %54 = tpu.matmul %53, %42, %cst_20 {dimension_numbers = #tpu.dot_dimension_numbers<[1], [1], [0], [0], [0, 0, 1, 0], [], []>} : vector<8x32xf32>, vector<8x32xf32>, vector<8x8xf32> -> vector<8x8xf32>
    %55 = vector.broadcast %17 : vector<1x8xf32> to vector<8x8xf32>
    %56 = arith.addf %54, %55 : vector<8x8xf32>
    %c0_21 = arith.constant 0 : index
    %c0_22 = arith.constant 0 : index
    %c0_23 = arith.constant 0 : index
    %57 = vector.load %arg5[%c0_21, %c0_22, %c0_23] : memref<1x8x8xf32, #tpu.memory_space<vmem>>, vector<1x8x8xf32>
    %58 = vector.shape_cast %57 : vector<1x8x8xf32> to vector<8x8xf32>
    %59 = vector.shape_cast %56 : vector<8x8xf32> to vector<1x8x8xf32>
    tpu.vector_store %arg5[%c0_21, %c0_22, %c0_23], %59 {strides = array<i32>} : memref<1x8x8xf32, #tpu.memory_space<vmem>>, vector<1x8x8xf32>,
    return
  }
  func.func @transform_0(%arg0: i32) -> (i32, i32, i32) {
    %c0_i32 = arith.constant 0 : i32
    %c0_i32_0 = arith.constant 0 : i32
    %c0_i32_1 = arith.constant 0 : i32
    return %arg0, %c0_i32, %c0_i32_0 : i32, i32, i32
  }
  func.func @transform_1(%arg0: i32) -> (i32, i32) {
    %c0_i32 = arith.constant 0 : i32
    %c0_i32_0 = arith.constant 0 : i32
    %c0_i32_1 = arith.constant 0 : i32
    return %c0_i32, %c0_i32_0 : i32, i32
  }
  func.func @transform_2(%arg0: i32) -> (i32, i32) {
    %c0_i32 = arith.constant 0 : i32
    %c0_i32_0 = arith.constant 0 : i32
    %c0_i32_1 = arith.constant 0 : i32
    return %c0_i32, %c0_i32_0 : i32, i32
  }
  func.func @transform_3(%arg0: i32) -> (i32, i32) {
    %c0_i32 = arith.constant 0 : i32
    %c0_i32_0 = arith.constant 0 : i32
    %c0_i32_1 = arith.constant 0 : i32
    return %c0_i32, %c0_i32_0 : i32, i32
  }
  func.func @transform_4(%arg0: i32) -> (i32, i32, i32) {
    %c0_i32 = arith.constant 0 : i32
    %c0_i32_0 = arith.constant 0 : i32
    %c0_i32_1 = arith.constant 0 : i32
    return %arg0, %c0_i32, %c0_i32_0 : i32, i32, i32
  }
  func.func @transform_5(%arg0: i32) -> (i32, i32) {
    %c0_i32 = arith.constant 0 : i32
    %c0_i32_0 = arith.constant 0 : i32
    %c0_i32_1 = arith.constant 0 : i32
    return %c0_i32, %c0_i32_0 : i32, i32
  }
}

</mosaic_0001>

<llo_original>
// kernel: deltanet_forward.1
$region0: #{deltanet_forward.1}
  #allocation0 [shape = 'u32[]', space=smem, size = 0x4, offset = 0x4, fixed_abs, tag = 'smem constant byte address 0x4 - core index']
  #allocation1 [shape = 'u32[144,128]{1,0:T(1,128)}', space=vmem, size = 0x12000, scoped, tag = 'internal scratch']
  %s0 = inlined_call_operand.vmem [shape: bf16[6,8,17], index: 0, kind: input, shape index: {}]
  %s1 = inlined_call_operand.vmem [shape: bf16[73,17], index: 1, kind: input, shape index: {}]
  %s2 = inlined_call_operand.hbm [shape: f32[8,32], index: 2, kind: input, shape index: {}, may-alias: {2,5}]
  %s3 = inlined_call_operand.vmem [shape: f32[1,8], index: 3, kind: input, shape index: {}]
  %s4 = inlined_call_operand.hbm [shape: f32[6,8,8], index: 4, kind: output, shape index: {0}]
  %s5 = inlined_call_operand.hbm [shape: f32[8,32], index: 5, kind: output, shape index: {1}, may-alias: {2,5}]
  %6 = xla_tuple %s4, %s5
  %s7 = sld [smem:[#allocation0]]
  $region65: #{deltanet_forward.1} parent=0
    _
  %s9 = ssub.s32 1, %s7
  %s10 = scalar_select 0, %s9, %s7
  $region1: #{deltanet_forward.1} parent=0
    #allocation2 [shape = 'u8[4096]{0}', space=vmem, size = 0x1000, scoped, tag = 'input window, operand 2, single buffered']
    #allocation3 [shape = 's32[2]{0}', space=sflag, size = 0x8, scoped, tag = 'scoped memory for deltanet_forward.1']
    #allocation4 [shape = 's32[2]{0}', space=sflag, size = 0x8, scoped, tag = 'scoped memory for deltanet_forward.1']
    #allocation5 [shape = 'u8[8192]{0}', space=vmem, size = 0x2000, scoped, tag = 'output window, operand 0']
    #allocation6 [shape = 'u8[4096]{0}', space=vmem, size = 0x1000, scoped, tag = 'output window, operand 1, single buffered']
    #allocation7 [shape = 's32[1]{0}', space=sflag, size = 0x4, scoped, tag = 'scoped memory for deltanet_forward.1']
    %11 = vsyncpa [#allocation3], 0
    %12 = vsyncpa [#allocation4], 0
    %s13 = scalar_lea.sflag [#allocation4], 1
    %14 = vsyncpa %s13, 0
    %15 = vsyncpa [#allocation7], 0
    loop: start=0, step=1, limit=8
    $region2: #{deltanet_forward.1} parent=1 // loop_pre_header
      _
    $region3: #{deltanet_forward.1} parent=1 // loop_header
      %s17 = sphi 0, %s21
      %p18 = scmp.ge.s32.totalorder %s17, 8
      %s27 = sphi 0, %s29
      %s30 = sphi 0, %s27
      %s31 = sphi 0, %s30
      %s47 = sphi 0, %s31
      %s51 = sphi 0, %s51
      %s53 = sphi 0, %s51
      %s54 = sphi 0, %s53
      %s68 = sphi 0, %s54
      %s72 = sphi 0, %s72
      %s74 = sphi 0, %s72
      %s75 = sphi 0, %s74
      %s89 = sphi 0, %s75
      %s93 = sphi 0, %s93
      %s95 = sphi 0, %s93
      %s96 = sphi 0, %s95
      %s110 = sphi 0, %s96
      %s116 = sphi 0, %s118
      %s119 = sphi 0, %s116
      %s120 = sphi 0, %s119
      %s136 = sphi 0, %s120
      %s140 = sphi 0, %s140
      %s142 = sphi 0, %s140
      %s143 = sphi 0, %s142
      %s157 = sphi 0, %s143
    $region4: #{deltanet_forward.1} parent=1 // loop_header_branch
      %20 = sbr.rel (%p18) target = $region8
    $region5: #{deltanet_forward.1} parent=1 // loop_body
      %s22 = ssub.s32 %s17, 1
      %s23 = ssub.s32 %s17, 2
      %s24 = sadd.s32 %s17, 1
      %s25 = ssub.s32 %s17, %s24
      %p26 = scmp.eq.s32.totalorder %s25, 0
      %s28 = sadd.s32 %s27, 1
      %s29 = scalar_select %p26, %s27, %s28
      %p32 = pneg %p26
      %p33 = scmp.eq.s32.totalorder %s17, 5
      %p34 = por %p32, %p33
      %p35 = scmp.ne.s32.totalorder %s27, %s30
      %p36 = scmp.eq.s32.totalorder %s17, 0
      %p37 = por %p35, %p36
      %p38 = scmp.ne.s32.totalorder %s27, %s30
      %p39 = scmp.eq.s32.totalorder %s22, 5
      %p40 = por %p38, %p39
      %p41 = scmp.ne.s32.totalorder %s30, %s31
      %p42 = scmp.eq.s32.totalorder %s22, 0
      %p43 = por %p41, %p42
      %p44 = scmp.ne.s32.totalorder %s30, %s31
      %p45 = scmp.eq.s32.totalorder %s23, 5
      %p46 = por %p44, %p45
      %p48 = scmp.ne.s32.totalorder %s31, %s47
      %p49 = scmp.eq.s32.totalorder %s23, 0
      %p50 = por %p48, %p49
      %s52 = sadd.s32 %s51, 1
      %p55 = scmp.eq.s32.totalorder %s17, 5
      %p56 = scmp.ne.s32.totalorder %s51, %s53
      %p57 = scmp.eq.s32.totalorder %s17, 0
      %p58 = por %p56, %p57
      %p59 = scmp.ne.s32.totalorder %s51, %s53
      %p60 = scmp.eq.s32.totalorder %s22, 5
      %p61 = por %p59, %p60
      %p62 = scmp.ne.s32.totalorder %s53, %s54
      %p63 = scmp.eq.s32.totalorder %s22, 0
      %p64 = por %p62, %p63
      %p65 = scmp.ne.s32.totalorder %s53, %s54
      %p66 = scmp.eq.s32.totalorder %s23, 5
      %p67 = por %p65, %p66
      %p69 = scmp.ne.s32.totalorder %s54, %s68
      %p70 = scmp.eq.s32.totalorder %s23, 0
      %p71 = por %p69, %p70
      %s73 = sadd.s32 %s72, 1
      %p76 = scmp.eq.s32.totalorder %s17, 5
      %p77 = scmp.ne.s32.totalorder %s72, %s74
      %p78 = scmp.eq.s32.totalorder %s17, 0
      %p79 = por %p77, %p78
      %p80 = scmp.ne.s32.totalorder %s72, %s74
      %p81 = scmp.eq.s32.totalorder %s22, 5
      %p82 = por %p80, %p81
      %p83 = scmp.ne.s32.totalorder %s74, %s75
      %p84 = scmp.eq.s32.totalorder %s22, 0
      %p85 = por %p83, %p84
      %p86 = scmp.ne.s32.totalorder %s74, %s75
      %p87 = scmp.eq.s32.totalorder %s23, 5
      %p88 = por %p86, %p87
      %p90 = scmp.ne.s32.totalorder %s75, %s89
      %p91 = scmp.eq.s32.totalorder %s23, 0
      %p92 = por %p90, %p91
      %s94 = sadd.s32 %s93, 1
      %p97 = scmp.eq.s32.totalorder %s17, 5
      %p98 = scmp.ne.s32.totalorder %s93, %s95
      %p99 = scmp.eq.s32.totalorder %s17, 0
      %p100 = por %p98, %p99
      %p101 = scmp.ne.s32.totalorder %s93, %s95
      %p102 = scmp.eq.s32.totalorder %s22, 5
      %p103 = por %p101, %p102
      %p104 = scmp.ne.s32.totalorder %s95, %s96
      %p105 = scmp.eq.s32.totalorder %s22, 0
      %p106 = por %p104, %p105
      %p107 = scmp.ne.s32.totalorder %s95, %s96
      %p108 = scmp.eq.s32.totalorder %s23, 5
      %p109 = por %p107, %p108
      %p111 = scmp.ne.s32.totalorder %s96, %s110
      %p112 = scmp.eq.s32.totalorder %s23, 0
      %p113 = por %p111, %p112
      %s114 = ssub.s32 %s17, %s24
      %p115 = scmp.eq.s32.totalorder %s114, 0
      %s117 = sadd.s32 %s116, 1
      %s118 = scalar_select %p115, %s116, %s117
      %p121 = pneg %p115
      %p122 = scmp.eq.s32.totalorder %s17, 5
      %p123 = por %p121, %p122
      %p124 = scmp.ne.s32.totalorder %s116, %s119
      %p125 = scmp.eq.s32.totalorder %s17, 0
      %p126 = por %p124, %p125
      %p127 = scmp.ne.s32.totalorder %s116, %s119
      %p128 = scmp.eq.s32.totalorder %s22, 5
      %p129 = por %p127, %p128
      %p130 = scmp.ne.s32.totalorder %s119, %s120
      %p131 = scmp.eq.s32.totalorder %s22, 0
      %p132 = por %p130, %p131
      %p133 = scmp.ne.s32.totalorder %s119, %s120
      %p134 = scmp.eq.s32.totalorder %s23, 5
      %p135 = por %p133, %p134
      %p137 = scmp.ne.s32.totalorder %s120, %s136
      %p138 = scmp.eq.s32.totalorder %s23, 0
      %p139 = por %p137, %p138
      %s141 = sadd.s32 %s140, 1
      %p144 = scmp.eq.s32.totalorder %s17, 5
      %p145 = scmp.ne.s32.totalorder %s140, %s142
      %p146 = scmp.eq.s32.totalorder %s17, 0
      %p147 = por %p145, %p146
      %p148 = scmp.ne.s32.totalorder %s140, %s142
      %p149 = scmp.eq.s32.totalorder %s22, 5
      %p150 = por %p148, %p149
      %p151 = scmp.ne.s32.totalorder %s142, %s143
      %p152 = scmp.eq.s32.totalorder %s22, 0
      %p153 = por %p151, %p152
      %p154 = scmp.ne.s32.totalorder %s142, %s143
      %p155 = scmp.eq.s32.totalorder %s23, 5
      %p156 = por %p154, %p155
      %p158 = scmp.ne.s32.totalorder %s143, %s157
      %p159 = scmp.eq.s32.totalorder %s23, 0
      %p160 = por %p158, %p159
      %p161 = scmp.le.s32.totalorder 1, %s17
      %p162 = scmp.lt.s32.totalorder %s17, 7
      %p163 = pnand %p161, %p162
      %p164 = pneg %p163
      // Predicated region
      $region9: #{deltanet_forward.1} parent=5 // pred_check
        _
      $region10: #{deltanet_forward.1} parent=5 // pred_check_branch
        %166 = sbr.rel (%p163) target = $region12
      $region11: #{deltanet_forward.1} parent=5 // pred_region
        %s167 = ssub.s32 %s17, 1
        // Predicated region
        $region13: #{deltanet_forward.1} parent=11 // pred_check
          %p168 = pneg %p64
        $region14: #{deltanet_forward.1} parent=11 // pred_check_branch
          %170 = sbr.rel (%p168) target = $region16
        $region15: #{deltanet_forward.1} parent=11 // pred_region
          _
        $region16: #{deltanet_forward.1} parent=11 // pred_fallthru
          _
        // Predicated region
        $region17: #{deltanet_forward.1} parent=11 // pred_check
          %p171 = pneg %p85
        $region18: #{deltanet_forward.1} parent=11 // pred_check_branch
          %173 = sbr.rel (%p171) target = $region20
        $region19: #{deltanet_forward.1} parent=11 // pred_region
          %s175 = ssub.s32 128, 128
          %176 = vsyncadd [#allocation3], %s175
          %s178 = sshll.u32 [#allocation2], 4
          %s179 = int_to_ptr.vmem [resolvable:$true] %s178
          %181 = dma.hbm_to_vmem [thread:$0]  %s2, 128, %s179, [#allocation3]
        $region20: #{deltanet_forward.1} parent=11 // pred_fallthru
          _
        // Predicated region
        $region21: #{deltanet_forward.1} parent=11 // pred_check
          %p182 = pneg %p106
        $region22: #{deltanet_forward.1} parent=11 // pred_check_branch
          %184 = sbr.rel (%p182) target = $region24
        $region23: #{deltanet_forward.1} parent=11 // pred_region
          _
        $region24: #{deltanet_forward.1} parent=11 // pred_fallthru
          _
      $region12: #{deltanet_forward.1} parent=5 // pred_fallthru
        _
      %p185 = scmp.lt.s32.totalorder %s17, 6
      // Predicated region
      $region25: #{deltanet_forward.1} parent=5 // pred_check
        %p186 = pneg %p185
      $region26: #{deltanet_forward.1} parent=5 // pred_check_branch
        %188 = sbr.rel (%p186) target = $region28
      $region27: #{deltanet_forward.1} parent=5 // pred_region
        // Predicated region
        $region29: #{deltanet_forward.1} parent=27 // pred_check
          %p189 = pneg %p37
        $region30: #{deltanet_forward.1} parent=27 // pred_check_branch
          %191 = sbr.rel (%p189) target = $region32
        $region31: #{deltanet_forward.1} parent=27 // pred_region
          %p192 = scmp.lt.s32.totalorder %s17, 5
          %s193 = scalar_select %p192, %s17, 5
          %s194 = smul.addr %s193, 4
          %s195 = scalar_lea.vmem %s0, %s194
        $region32: #{deltanet_forward.1} parent=27 // pred_fallthru
          _
      $region28: #{deltanet_forward.1} parent=5 // pred_fallthru
        _
      %p196 = scmp.le.s32.totalorder 1, %s17
      %p197 = scmp.lt.s32.totalorder %s17, 7
      %p198 = pnand %p196, %p197
      %p199 = pneg %p198
      // Predicated region
      $region33: #{deltanet_forward.1} parent=5 // pred_check
        _
      $region34: #{deltanet_forward.1} parent=5 // pred_check_branch
        %201 = sbr.rel (%p198) target = $region36
      $region35: #{deltanet_forward.1} parent=5 // pred_region
        %s202 = ssub.s32 %s17, 1
        // Predicated region
        $region37: #{deltanet_forward.1} parent=35 // pred_check
          %p203 = pneg %p85
        $region38: #{deltanet_forward.1} parent=35 // pred_check_branch
          %205 = sbr.rel (%p203) target = $region40
        $region39: #{deltanet_forward.1} parent=35 // pred_region
          %206 = dma.done [#allocation3], 128
        $region40: #{deltanet_forward.1} parent=35 // pred_fallthru
          _
        %p207 = scmp.lt.s32.totalorder %s22, 5
        %s208 = scalar_select %p207, %s22, 5
        %s209 = smul.addr %s208, 4
        %s210 = scalar_lea.vmem %s0, %s209
        %p211 = pneg %p43
        %p212 = pneg %p40
        %p213 = pneg %p64
        %p214 = pneg %p61
        %p215 = pneg %p85
        %p216 = pneg %p82
        %p217 = pneg %p106
        %p218 = pneg %p103
        %p219 = pneg %p132
        %p220 = pneg %p129
        %s221 = sand.u32 %s119, 1
        %s222 = scalar_lea.sflag [#allocation4], %s221
        %s223 = sand.u32 %s119, 1
        %s224 = smul.addr %s223, 8
        %s225 = scalar_lea.vmem [#allocation5], %s224
        %p226 = pneg %p153
        %p227 = pneg %p150
        %p228 = scmp.lt.s32.totalorder %s22, 5
        %s229 = scalar_select %p228, %s22, 5
        %s230 = smul.addr %s229, 4
        %s231 = scalar_lea.vmem %s0, %s230
        %p233 = scmp.eq.s32.totalorder %s22, 0
        // Predicated region
        $region41: #{deltanet_forward.1} parent=35 // pred_check
          %p234 = pneg %p233
        $region42: #{deltanet_forward.1} parent=35 // pred_check_branch
          %236 = sbr.rel (%p234) target = $region44
        $region43: #{deltanet_forward.1} parent=35 // pred_region
          %v237 = vld [vmem:[#allocation2] sm:$0xff]
          %vm238 = vcmask 261120
          %239 = vst.msk [vmem:[#allocation6] sm:$0xff] %vm238, %v237
        $region44: #{deltanet_forward.1} parent=35 // pred_fallthru
          _
        %v240 = vld [vmem:[%s231] sm:$0xf]
        %v241 = vld [vmem:[%s1] sm:$0xf]
        %v242 = vld [vmem:[%s1 + $0x4] sm:$0xf]
        %v243 = vld [vmem:[%s1 + $0x8] sm:$0xf]
        %v244 = vld [vmem:[%s1 + $0xc] sm:$0xf]
        %v245 = vld [vmem:[%s1 + $0x10] sm:$0xf]
        %v246 = vld [vmem:[%s1 + $0x14] sm:$0xf]
        %v247 = vld [vmem:[%s1 + $0x18] sm:$0xf]
        %v248 = vld [vmem:[%s1 + $0x1c] sm:$0xf]
        %v249 = vld [vmem:[%s1 + $0x20] sm:$0xf]
        %v250 = vld [vmem:[%s1 + $0x24] sm:$0x1]
        %v261 = vunpack.c.l.b16 %v241
        %v262 = vunpack.c.l.b16 %v242
        %v263 = vunpack.c.l.b16 %v243
        %v264 = vunpack.c.l.b16 %v244
        %v265 = vunpack.c.l.b16 %v245
        %v266 = vunpack.c.l.b16 %v246
        %v267 = vunpack.c.l.b16 %v247
        %v268 = vunpack.c.l.b16 %v248
        %v269 = vunpack.c.l.b16 %v249
        %v270 = vunpack.c.l.b16 %v250
        %v271 = vpack.c.b16 %v262, %v261
        %v272 = vpack.c.b16 %v264, %v263
        %v273 = vpack.c.b16 %v266, %v265
        %v274 = vpack.c.b16 %v268, %v267
        %v275 = vpack.c.b16 %v270, %v269
        %vm276 = vcmask 138240
        %v278 = vsel %vm276, %v240, 0
        %v281 = vsel %vm276, %v271, 0
        %v284 = vsel %vm276, %v272, 0
        %v287 = vsel %vm276, %v273, 0
        %v290 = vsel %vm276, %v274, 0
        %v293 = vsel %vm276, %v275, 0
        %295 = vmatprep.subr.bf16.mxu0 0
        %296 = vmatpush1.bf16.xpose.msra.mxu0 %v281
        %297 = vmatprep.subr.bf16.mxu0 0
        %298 = vmatpush1.bf16.xpose.msra.mxu0 %v284
        %299 = vmatprep.subr.bf16.mxu0 0
        %300 = vmatpush1.bf16.xpose.msra.mxu0 %v287
        %301 = vmatprep.subr.bf16.mxu0 0
        %302 = vmatpush1.bf16.xpose.msra.mxu0 %v290
        %303 = vmatprep.subr.bf16.mxu0 0
        %304 = vmatpush1.bf16.xpose.msra.mxu0 %v293
        %305 = vmatprep.subr.bf16.mxu0 0
        %306 = vmatpush1.bf16.xpose.msra.mxu0 0
        %307 = vmatprep.subr.bf16.mxu0 0
        %308 = vmatpush1.bf16.xpose.msra.mxu0 0
        %309 = vmatprep.subr.bf16.mxu0 0
        %310 = vmatpush1.bf16.xpose.msra.mxu0 0
        %311 = vmatprep.subr.bf16.mxu0 0
        %312 = vmatpush1.bf16.xpose.msra.mxu0 0
        %313 = vmatprep.subr.bf16.mxu0 0
        %314 = vmatpush1.bf16.xpose.msra.mxu0 0
        %315 = vmatprep.subr.bf16.mxu0 0
        %316 = vmatpush1.bf16.xpose.msra.mxu0 0
        %317 = vmatprep.subr.bf16.mxu0 0
        %318 = vmatpush1.bf16.xpose.msra.mxu0 0
        %319 = vmatprep.subr.bf16.mxu0 0
        %320 = vmatpush1.bf16.xpose.msra.mxu0 0
        %321 = vmatprep.subr.bf16.mxu0 0
        %322 = vmatpush1.bf16.xpose.msra.mxu0 0
        %323 = vmatprep.subr.bf16.mxu0 0
        %324 = vmatpush1.bf16.xpose.msra.mxu0 0
        %325 = vmatprep.subr.bf16.mxu0 0
        %326 = vmatpush1.bf16.xpose.msra.mxu0 0
        %327 = vmatprep.mubr.bf16.mxu0 0
        %328 = vmatmul.mubr.bf16.gmra.mrb[0].mxu0 %v278
        %v329 = vpop.f32.mrb[0].mxu0
        %v330 = vadd.f32 0.0, %v329
        %v331 = vpop.f32.mrb[0].mxu0
        %v332 = vpop.f32.mrb[0].mxu0
        %v333 = vpop.f32.mrb[0].mxu0
        %334 = vdwg.mxu0
        %v335 = vxor.u32 %v330, 2147483648
        %v336 = vmul.f32 %v335, 1.442695
        %v337 = vpow.pop %v336
        %v338 = vadd.f32 %v337, 1.0
        %v339 = vrcp.pop %v338
        %v340 = vmul.f32 1.0, %v339
        %v341 = vld [vmem:[#allocation6] sm:$0xff]
        %v342 = vld [vmem:[%s3] sm:$0x1]
        %vm343 = vcmask 269320
        %v344 = vsel %vm343, %v330, -inf
        %345 = vmax.xlane.f32.xlu0 %v344
        %v346 = vpop.xlane.xlu0 %345
        %v347 = vsub.f32 %v330, %v346
        %v348 = vmul.f32 %v347, 1.442695
        %v349 = vpow.pop %v348
        %351 = vrot.lane.b32.xlu0 %v349, 127
        %v352 = vpop.permute.xlu0 %351
        %vm354 = vcmask 261120
        %v355 = vsel %vm354, %v352, 0.0
        %356 = vadd.xlane.f32.xlu0 %v355
        %v357 = vpop.xlane.xlu0 %356
        %v358 = vrcp.pop %v357
        %v359 = vmul.f32 %v349, %v358
        %v361 = vlaneseq
        %v362 = vshrl.u32 %v361, 7
        %v363 = vsub.s32 0, %v362
        %v364 = vrot.slane %v342, %v363
        %367 = vrot.lane.b32.xlu0 %v359, 127
        %v368 = vpop.permute.xlu0 %367
        %v369 = vsel %vm354, %v368, 0
        %v372 = vsel %vm354, %v341, 0
        %374 = vmatprep.subr.mxu0 0.0
        %375 = vmatpush1.xpose.msra.mxu0 %v372
        %376 = vmatprep.subr.mxu0 0.0
        %377 = vmatpush1.xpose.msra.mxu0 0.0
        %378 = vmatprep.subr.mxu0 0.0
        %379 = vmatpush1.xpose.msra.mxu0 0.0
        %380 = vmatprep.subr.mxu0 0.0
        %381 = vmatpush1.xpose.msra.mxu0 0.0
        %382 = vmatprep.subr.mxu0 0.0
        %383 = vmatpush1.xpose.msra.mxu0 0.0
        %384 = vmatprep.subr.mxu0 0.0
        %385 = vmatpush1.xpose.msra.mxu0 0.0
        %386 = vmatprep.subr.mxu0 0.0
        %387 = vmatpush1.xpose.msra.mxu0 0.0
        %388 = vmatprep.subr.mxu0 0.0
        %389 = vmatpush1.xpose.msra.mxu0 0.0
        %390 = vmatprep.subr.mxu0 0.0
        %391 = vmatpush1.xpose.msra.mxu0 0.0
        %392 = vmatprep.subr.mxu0 0.0
        %393 = vmatpush1.xpose.msra.mxu0 0.0
        %394 = vmatprep.subr.mxu0 0.0
        %395 = vmatpush1.xpose.msra.mxu0 0.0
        %396 = vmatprep.subr.mxu0 0.0
        %397 = vmatpush1.xpose.msra.mxu0 0.0
        %398 = vmatprep.subr.mxu0 0.0
        %399 = vmatpush1.xpose.msra.mxu0 0.0
        %400 = vmatprep.subr.mxu0 0.0
        %401 = vmatpush1.xpose.msra.mxu0 0.0
        %402 = vmatprep.subr.mxu0 0.0
        %403 = vmatpush1.xpose.msra.mxu0 0.0
        %404 = vmatprep.subr.mxu0 0.0
        %405 = vmatpush1.xpose.msra.mxu0 0.0
        %406 = vmatprep.subr.mxu0 0.0
        %407 = vmatpush1.xpose.msra.mxu0 0.0
        %408 = vmatprep.subr.mxu0 0.0
        %409 = vmatpush1.xpose.msra.mxu0 0.0
        %410 = vmatprep.subr.mxu0 0.0
        %411 = vmatpush1.xpose.msra.mxu0 0.0
        %412 = vmatprep.subr.mxu0 0.0
        %413 = vmatpush1.xpose.msra.mxu0 0.0
        %414 = vmatprep.subr.mxu0 0.0
        %415 = vmatpush1.xpose.msra.mxu0 0.0
        %416 = vmatprep.subr.mxu0 0.0
        %417 = vmatpush1.xpose.msra.mxu0 0.0
        %418 = vmatprep.subr.mxu0 0.0
        %419 = vmatpush1.xpose.msra.mxu0 0.0
        %420 = vmatprep.subr.mxu0 0.0
        %421 = vmatpush1.xpose.msra.mxu0 0.0
        %422 = vmatprep.subr.mxu0 0.0
        %423 = vmatpush1.xpose.msra.mxu0 0.0
        %424 = vmatprep.subr.mxu0 0.0
        %425 = vmatpush1.xpose.msra.mxu0 0.0
        %426 = vmatprep.subr.mxu0 0.0
        %427 = vmatpush1.xpose.msra.mxu0 0.0
        %428 = vmatprep.subr.mxu0 0.0
        %429 = vmatpush1.xpose.msra.mxu0 0.0
        %430 = vmatprep.subr.mxu0 0.0
        %431 = vmatpush1.xpose.msra.mxu0 0.0
        %432 = vmatprep.subr.mxu0 0.0
        %433 = vmatpush1.xpose.msra.mxu0 0.0
        %434 = vmatprep.subr.mxu0 0.0
        %435 = vmatpush1.xpose.msra.mxu0 0.0
        %436 = vmatprep.subr.mxu0 0.0
        %437 = vmatpush1.xpose.msra.mxu0 0.0
        %438 = vmatprep.mubr.f32.mxu0 0.0
        %439 = vmatmul.mubr.f32.gmra.mrb[0].mxu0 %v369
        %v440 = vpop.f32.mrb[0].mxu0
        %v441 = vadd.f32 %v364, %v440
        %v442 = vpop.f32.mrb[0].mxu0
        %443 = vdwg.mxu0
        %445 = vrot.lane.b32.xlu0 %v441, 33
        %v446 = vpop.permute.xlu0 %445
        %v448 = vsub.f32 %v330, %v446
        %450 = vrot.lane.b32.xlu0 %v448, 95
        %v451 = vpop.permute.xlu0 %450
        %453 = vxpose.xlu0.b32.start [1/16] %v451, 128
        %454 = vxpose.xlu0.b32.cont [2/16] 0.0, 128
        %455 = vxpose.xlu0.b32.cont [3/16] 0.0, 128
        %456 = vxpose.xlu0.b32.cont [4/16] 0.0, 128
        %457 = vxpose.xlu0.b32.cont [5/16] 0.0, 128
        %458 = vxpose.xlu0.b32.cont [6/16] 0.0, 128
        %459 = vxpose.xlu0.b32.cont [7/16] 0.0, 128
        %460 = vxpose.xlu0.b32.cont [8/16] 0.0, 128
        %461 = vxpose.xlu0.b32.cont [9/16] 0.0, 128
        %462 = vxpose.xlu0.b32.cont [10/16] 0.0, 128
        %463 = vxpose.xlu0.b32.cont [11/16] 0.0, 128
        %464 = vxpose.xlu0.b32.cont [12/16] 0.0, 128
        %465 = vxpose.xlu0.b32.cont [13/16] 0.0, 128
        %466 = vxpose.xlu0.b32.cont [14/16] 0.0, 128
        %467 = vxpose.xlu0.b32.cont [15/16] 0.0, 128
        %468 = vxpose.xlu0.b32.end [16/16] 0.0, 128
        %v469 = vpop.trf.xlu0
        %v470 = vpop.trf.xlu0
        %v471 = vpop.trf.xlu0
        %v472 = vpop.trf.xlu0
        %v473 = vpop.trf.xlu0
        %v474 = vpop.trf.xlu0
        %v475 = vpop.trf.xlu0
        %v476 = vpop.trf.xlu0
        %v477 = vpop.trf.xlu0
        %v478 = vpop.trf.xlu0
        %v479 = vpop.trf.xlu0
        %v480 = vpop.trf.xlu0
        %v481 = vpop.trf.xlu0
        %v482 = vpop.trf.xlu0
        %v483 = vpop.trf.xlu0
        %v484 = vpop.trf.xlu0
        %486 = vrot.lane.b32.xlu0 %v340, 127
        %v487 = vpop.permute.xlu0 %486
        %vm489 = vcmask 64512
        %v491 = vsel %vm489, %v469, 0
        %493 = vmatprep.subr.mxu0 0.0
        %494 = vmatpush1.msra.mxu0 %v487
        %495 = vmatprep.subr.mxu0 0.0
        %496 = vmatpush1.msra.mxu0 0.0
        %497 = vmatprep.subr.mxu0 0.0
        %498 = vmatpush1.msra.mxu0 0.0
        %499 = vmatprep.subr.mxu0 0.0
        %500 = vmatpush1.msra.mxu0 0.0
        %501 = vmatprep.subr.mxu0 0.0
        %502 = vmatpush1.msra.mxu0 0.0
        %503 = vmatprep.subr.mxu0 0.0
        %504 = vmatpush1.msra.mxu0 0.0
        %505 = vmatprep.subr.mxu0 0.0
        %506 = vmatpush1.msra.mxu0 0.0
        %507 = vmatprep.subr.mxu0 0.0
        %508 = vmatpush1.msra.mxu0 0.0
        %509 = vmatprep.subr.mxu0 0.0
        %510 = vmatpush1.msra.mxu0 0.0
        %511 = vmatprep.subr.mxu0 0.0
        %512 = vmatpush1.msra.mxu0 0.0
        %513 = vmatprep.subr.mxu0 0.0
        %514 = vmatpush1.msra.mxu0 0.0
        %515 = vmatprep.subr.mxu0 0.0
        %516 = vmatpush1.msra.mxu0 0.0
        %517 = vmatprep.subr.mxu0 0.0
        %518 = vmatpush1.msra.mxu0 0.0
        %519 = vmatprep.subr.mxu0 0.0
        %520 = vmatpush1.msra.mxu0 0.0
        %521 = vmatprep.subr.mxu0 0.0
        %522 = vmatpush1.msra.mxu0 0.0
        %523 = vmatprep.subr.mxu0 0.0
        %524 = vmatpush1.msra.mxu0 0.0
        %525 = vmatprep.subr.mxu0 0.0
        %526 = vmatpush1.msra.mxu0 0.0
        %527 = vmatprep.subr.mxu0 0.0
        %528 = vmatpush1.msra.mxu0 0.0
        %529 = vmatprep.subr.mxu0 0.0
        %530 = vmatpush1.msra.mxu0 0.0
        %531 = vmatprep.subr.mxu0 0.0
        %532 = vmatpush1.msra.mxu0 0.0
        %533 = vmatprep.subr.mxu0 0.0
        %534 = vmatpush1.msra.mxu0 0.0
        %535 = vmatprep.subr.mxu0 0.0
        %536 = vmatpush1.msra.mxu0 0.0
        %537 = vmatprep.subr.mxu0 0.0
        %538 = vmatpush1.msra.mxu0 0.0
        %539 = vmatprep.subr.mxu0 0.0
        %540 = vmatpush1.msra.mxu0 0.0
        %541 = vmatprep.subr.mxu0 0.0
        %542 = vmatpush1.msra.mxu0 0.0
        %543 = vmatprep.subr.mxu0 0.0
        %544 = vmatpush1.msra.mxu0 0.0
        %545 = vmatprep.subr.mxu0 0.0
        %546 = vmatpush1.msra.mxu0 0.0
        %547 = vmatprep.subr.mxu0 0.0
        %548 = vmatpush1.msra.mxu0 0.0
        %549 = vmatprep.subr.mxu0 0.0
        %550 = vmatpush1.msra.mxu0 0.0
        %551 = vmatprep.subr.mxu0 0.0
        %552 = vmatpush1.msra.mxu0 0.0
        %553 = vmatprep.subr.mxu0 0.0
        %554 = vmatpush1.msra.mxu0 0.0
        %555 = vmatprep.subr.mxu0 0.0
        %556 = vmatpush1.msra.mxu0 0.0
        %557 = vmatprep.mubr.f32.mxu0 0.0
        %558 = vmatmul.mubr.f32.gmra.mrb[0].mxu0 %v491
        %v559 = vpop.f32.mrb[0].mxu0
        %v560 = vadd.f32 0.0, %v559
        %v561 = vpop.f32.mrb[0].mxu0
        %562 = vdwg.mxu0
        %v563 = vmul.f32 %v340, 0.125
        %565 = vset.pattern.permute.xlu0 0
        %566 = vperm.xlu0 %565, %v563
        %v567 = vpop.permute.xlu0 %566
        %v569 = vmul.f32 %v567, %v560
        %v570 = vadd.f32 %v341, %v569
        %571 = vst.msk [vmem:[#allocation6] sm:$0xff] %vm354, %v570
        %vm572 = vcmask 597320
        %v573 = vsel %vm572, %v330, -inf
        %574 = vmax.xlane.f32.xlu0 %v573
        %v575 = vpop.xlane.xlu0 %574
        %v576 = vsub.f32 %v330, %v575
        %v577 = vmul.f32 %v576, 1.442695
        %v578 = vpow.pop %v577
        %580 = vrot.lane.b32.xlu0 %v578, 87
        %v581 = vpop.permute.xlu0 %580
        %v583 = vsel %vm354, %v581, 0.0
        %584 = vadd.xlane.f32.xlu0 %v583
        %v585 = vpop.xlane.xlu0 %584
        %v586 = vrcp.pop %v585
        %v587 = vmul.f32 %v578, %v586
        %589 = vrot.lane.b32.xlu0 %v587, 87
        %v590 = vpop.permute.xlu0 %589
        %v591 = vsel %vm354, %v590, 0
        %v594 = vsel %vm354, %v570, 0
        %596 = vmatprep.subr.mxu0 0.0
        %597 = vmatpush1.xpose.msra.mxu0 %v594
        %598 = vmatprep.subr.mxu0 0.0
        %599 = vmatpush1.xpose.msra.mxu0 0.0
        %600 = vmatprep.subr.mxu0 0.0
        %601 = vmatpush1.xpose.msra.mxu0 0.0
        %602 = vmatprep.subr.mxu0 0.0
        %603 = vmatpush1.xpose.msra.mxu0 0.0
        %604 = vmatprep.subr.mxu0 0.0
        %605 = vmatpush1.xpose.msra.mxu0 0.0
        %606 = vmatprep.subr.mxu0 0.0
        %607 = vmatpush1.xpose.msra.mxu0 0.0
        %608 = vmatprep.subr.mxu0 0.0
        %609 = vmatpush1.xpose.msra.mxu0 0.0
        %610 = vmatprep.subr.mxu0 0.0
        %611 = vmatpush1.xpose.msra.mxu0 0.0
        %612 = vmatprep.subr.mxu0 0.0
        %613 = vmatpush1.xpose.msra.mxu0 0.0
        %614 = vmatprep.subr.mxu0 0.0
        %615 = vmatpush1.xpose.msra.mxu0 0.0
        %616 = vmatprep.subr.mxu0 0.0
        %617 = vmatpush1.xpose.msra.mxu0 0.0
        %618 = vmatprep.subr.mxu0 0.0
        %619 = vmatpush1.xpose.msra.mxu0 0.0
        %620 = vmatprep.subr.mxu0 0.0
        %621 = vmatpush1.xpose.msra.mxu0 0.0
        %622 = vmatprep.subr.mxu0 0.0
        %623 = vmatpush1.xpose.msra.mxu0 0.0
        %624 = vmatprep.subr.mxu0 0.0
        %625 = vmatpush1.xpose.msra.mxu0 0.0
        %626 = vmatprep.subr.mxu0 0.0
        %627 = vmatpush1.xpose.msra.mxu0 0.0
        %628 = vmatprep.subr.mxu0 0.0
        %629 = vmatpush1.xpose.msra.mxu0 0.0
        %630 = vmatprep.subr.mxu0 0.0
        %631 = vmatpush1.xpose.msra.mxu0 0.0
        %632 = vmatprep.subr.mxu0 0.0
        %633 = vmatpush1.xpose.msra.mxu0 0.0
        %634 = vmatprep.subr.mxu0 0.0
        %635 = vmatpush1.xpose.msra.mxu0 0.0
        %636 = vmatprep.subr.mxu0 0.0
        %637 = vmatpush1.xpose.msra.mxu0 0.0
        %638 = vmatprep.subr.mxu0 0.0
        %639 = vmatpush1.xpose.msra.mxu0 0.0
        %640 = vmatprep.subr.mxu0 0.0
        %641 = vmatpush1.xpose.msra.mxu0 0.0
        %642 = vmatprep.subr.mxu0 0.0
        %643 = vmatpush1.xpose.msra.mxu0 0.0
        %644 = vmatprep.subr.mxu0 0.0
        %645 = vmatpush1.xpose.msra.mxu0 0.0
        %646 = vmatprep.subr.mxu0 0.0
        %647 = vmatpush1.xpose.msra.mxu0 0.0
        %648 = vmatprep.subr.mxu0 0.0
        %649 = vmatpush1.xpose.msra.mxu0 0.0
        %650 = vmatprep.subr.mxu0 0.0
        %651 = vmatpush1.xpose.msra.mxu0 0.0
        %652 = vmatprep.subr.mxu0 0.0
        %653 = vmatpush1.xpose.msra.mxu0 0.0
        %654 = vmatprep.subr.mxu0 0.0
        %655 = vmatpush1.xpose.msra.mxu0 0.0
        %656 = vmatprep.subr.mxu0 0.0
        %657 = vmatpush1.xpose.msra.mxu0 0.0
        %658 = vmatprep.subr.mxu0 0.0
        %659 = vmatpush1.xpose.msra.mxu0 0.0
        %660 = vmatprep.mubr.f32.mxu0 0.0
        %661 = vmatmul.mubr.f32.gmra.mrb[0].mxu0 %v591
        %v662 = vpop.f32.mrb[0].mxu0
        %v663 = vadd.f32 %v364, %v662
        %v664 = vpop.f32.mrb[0].mxu0
        %665 = vdwg.mxu0
        %666 = vst.msk [vmem:[%s225] sm:$0xff] %vm489, %v663
        %s667 = sand.u32 %s119, 1
        %s668 = scalar_lea.sflag [#allocation4], %s667
        %s669 = sand.u32 %s119, 1
        %s670 = smul.addr %s669, 8
        %s671 = scalar_lea.vmem [#allocation5], %s670
        // Predicated region
        $region45: #{deltanet_forward.1} parent=35 // pred_check
          %p672 = pneg %p129
        $region46: #{deltanet_forward.1} parent=35 // pred_check_branch
          %674 = sbr.rel (%p672) target = $region48
        $region47: #{deltanet_forward.1} parent=35 // pred_region
          %s676 = ssub.s32 128, 128
          %677 = vsyncadd %s668, %s676
          %s678 = smul.addr %s22, 128
          %s679 = scalar_lea.hbm %s4, %s678
          %s681 = sshll.u32 %s671, 4
          %s682 = int_to_ptr.vmem [resolvable:$true] %s681
          %684 = dma.vmem_to_hbm [thread:$0]  %s682, 128, %s679, %s668
        $region48: #{deltanet_forward.1} parent=35 // pred_fallthru
          _
        // Predicated region
        $region49: #{deltanet_forward.1} parent=35 // pred_check
          %p685 = pneg %p150
        $region50: #{deltanet_forward.1} parent=35 // pred_check_branch
          %687 = sbr.rel (%p685) target = $region52
        $region51: #{deltanet_forward.1} parent=35 // pred_region
          %s689 = ssub.s32 128, 128
          %690 = vsyncadd [#allocation7], %s689
          %s692 = sshll.u32 [#allocation6], 4
          %s693 = int_to_ptr.vmem [resolvable:$true] %s692
          %695 = dma.vmem_to_hbm [thread:$0]  %s693, 128, %s5, [#allocation7]
        $region52: #{deltanet_forward.1} parent=35 // pred_fallthru
          _
        // Predicated region
        $region53: #{deltanet_forward.1} parent=35 // pred_check
          %p696 = pneg %p150
        $region54: #{deltanet_forward.1} parent=35 // pred_check_branch
          %698 = sbr.rel (%p696) target = $region56
        $region55: #{deltanet_forward.1} parent=35 // pred_region
          %699 = dma.done [#allocation7], 128
        $region56: #{deltanet_forward.1} parent=35 // pred_fallthru
          _
      $region36: #{deltanet_forward.1} parent=5 // pred_fallthru
        _
      %p700 = scmp.le.s32.totalorder 2, %s17
      // Predicated region
      $region57: #{deltanet_forward.1} parent=5 // pred_check
        %p701 = pneg %p700
      $region58: #{deltanet_forward.1} parent=5 // pred_check_branch
        %703 = sbr.rel (%p701) target = $region60
      $region59: #{deltanet_forward.1} parent=5 // pred_region
        %s704 = ssub.s32 %s17, 2
        // Predicated region
        $region61: #{deltanet_forward.1} parent=59 // pred_check
          %p705 = pneg %p135
        $region62: #{deltanet_forward.1} parent=59 // pred_check_branch
          %707 = sbr.rel (%p705) target = $region64
        $region63: #{deltanet_forward.1} parent=59 // pred_region
          %s708 = sand.u32 %s120, 1
          %s709 = scalar_lea.sflag [#allocation4], %s708
          %s710 = sand.u32 %s120, 1
          %s711 = smul.addr %s710, 8
          %s712 = scalar_lea.vmem [#allocation5], %s711
          %713 = dma.done %s709, 128
        $region64: #{deltanet_forward.1} parent=59 // pred_fallthru
          _
      $region60: #{deltanet_forward.1} parent=5 // pred_fallthru
        _
    $region6: #{deltanet_forward.1} parent=1 // loop_footer
      %s21 = sadd.s32 1, %s17
    $region7: #{deltanet_forward.1} parent=1 // loop_footer_branch
      %16 = sbr.rel target = $region3
    $region8: #{deltanet_forward.1} parent=1 // loop_exit
      _
    %714 = vsyncpa [#allocation3], 1
    %s715 = scalar_lea.sflag [#allocation3], 1
    %716 = vsyncpa %s715, 1
    %717 = vsyncpa [#allocation4], 1
    %s718 = scalar_lea.sflag [#allocation4], 1
    %719 = vsyncpa %s718, 1
    %720 = vsyncpa [#allocation7], 1

</llo_original>
